<compile_context>
chip_gen: v7x
topology: tpu7x:2x2x1
jax: 0.10.0
libtpu: 0.0.40
codegen_flags: <defaults>
</compile_context>

<pallas_src>
import jax
import jax.numpy as jnp
from jax.experimental import pallas as pl
from jax.experimental.pallas import tpu as pltpu


PRELU_INIT = 0.25        # nn.PReLU() default weight; the module re-creates it every forward
TILE_B = 65536           # max batch lanes per grid step (multiple of 128)
LANE = 128               # lane width / alignment unit
SMALL_BATCH = 4096       # below this, a plain-JAX fused dot wins over the Pallas launch


def _cdiv(a, b):
    return (a + b - 1) // b


def _round_up(n, m):
    return _cdiv(n, m) * m


def net_kernel(xT_ref, w1_ref, b1_ref, w2_ref, b2_ref, o_ref):
    # xT_ref: (3, tile)   w1_ref: (10, 3)  b1_ref: (10, 1)
    # w2_ref: (2, 10)     b2_ref: (2, 1)   o_ref:  (2, tile)
    h = jnp.dot(w1_ref[...], xT_ref[...], preferred_element_type=jnp.float32) + b1_ref[...]
    h = jnp.where(h >= 0.0, h, PRELU_INIT * h)          # PReLU, single shared weight = 0.25
    out = jnp.dot(w2_ref[...], h, preferred_element_type=jnp.float32) + b2_ref[...]
    o_ref[...] = out.astype(o_ref.dtype)


def _choose_tiling(B):
    """Pick (tile, n_tiles, padded_B): lane-aligned, <= TILE_B, >= 2 tiles when B allows."""
    Bp = max(_round_up(B, LANE), LANE)
    n_tiles = _cdiv(Bp, TILE_B)
    if Bp >= 2 * LANE:
        n_tiles = max(n_tiles, 2)        # keep both v7x TensorCores busy
    tile = _round_up(_cdiv(Bp, n_tiles), LANE)
    return tile, n_tiles, n_tiles * tile


def net_forward_feature_major(xT, w1, b1, w2, b2, decode=True):
    """Primary (fast) API. xT: (3, B) f32 feature-major. Returns (2, B) f32 feature-major."""
    f_in, B = xT.shape
    assert f_in == 3, "expected feature-major (3, B) input"
    tile, n_tiles, Bpad = _choose_tiling(B)

    xT = xT.astype(jnp.float32)
    if Bpad != B:
        xT = jnp.pad(xT, ((0, 0), (0, Bpad - B)))   # single pad copy, only when not aligned

    flops = (2 * 3 * 10 + 10 + 2 + 2 * 10 * 2 + 2) * Bpad            # ~114 flops / element
    bytes_accessed = (3 + 2) * 4 * Bpad + 4 * (10 * 3 + 10 + 2 * 10 + 2)

    out_T = pl.pallas_call(
        net_kernel,
        out_shape=jax.ShapeDtypeStruct((2, Bpad), jnp.float32),
        grid_spec=pltpu.PrefetchScalarGridSpec(
            num_scalar_prefetch=0,
            grid=(n_tiles,),
            in_specs=[
                pl.BlockSpec((3, tile), lambda i: (0, i)),   # x streams along lanes
                pl.BlockSpec((10, 3), lambda i: (0, 0)),     # weights resident every step
                pl.BlockSpec((10, 1), lambda i: (0, 0)),
                pl.BlockSpec((2, 10), lambda i: (0, 0)),
                pl.BlockSpec((2, 1), lambda i: (0, 0)),
            ],
            out_specs=pl.BlockSpec((2, tile), lambda i: (0, i)),
        ),
        compiler_params=pltpu.CompilerParams(
            dimension_semantics=("parallel",),               # megacore / 2-TC sharding
            vmem_limit_bytes=32 * 1024 * 1024,               # headroom on v5e; safe on v6e/v7x
        ),
        cost_estimate=pl.CostEstimate(
            flops=flops, transcendentals=0, bytes_accessed=bytes_accessed),
    )(xT, w1, b1, w2, b2)

    if Bpad != B:
        out_T = out_T[:, :B]
    # decode(x) == x (identity), so nothing to do either way.
    return out_T


def net_forward(x, w1, b1, w2, b2, decode=True, use_pallas=None):
    """Batch-major convenience wrapper. x: (B, 3) f32 -> (B, 2) f32.

    For small batches the plain-JAX path avoids the transpose + kernel-launch fixed cost;
    large batches route through the feature-major Pallas kernel.
    """
    B = x.shape[0]
    if use_pallas is None:
        use_pallas = B >= SMALL_BATCH
    if not use_pallas:
        return net_reference(x, w1, b1, w2, b2)
    out_T = net_forward_feature_major(jnp.transpose(x), w1, b1, w2, b2, decode)
    return jnp.transpose(out_T)


def init_params(key):
    """Deterministic synthetic params matching nn.Linear(3,10) and nn.Linear(10,2).

    Shapes follow PyTorch (out_features, in_features); biases are (out_features, 1) columns.
    """
    k1, k2, k3, k4 = jax.random.split(key, 4)
    lim1 = 1.0 / jnp.sqrt(3.0)    # fan_in = 3
    lim2 = 1.0 / jnp.sqrt(10.0)   # fan_in = 10
    w1 = jax.random.uniform(k1, (10, 3), jnp.float32, -lim1, lim1)
    b1 = jax.random.uniform(k2, (10, 1), jnp.float32, -lim1, lim1)
    w2 = jax.random.uniform(k3, (2, 10), jnp.float32, -lim2, lim2)
    b2 = jax.random.uniform(k4, (2, 1), jnp.float32, -lim2, lim2)
    return w1, b1, w2, b2


def net_reference(x, w1, b1, w2, b2):
    h = x @ w1.T + b1[:, 0]
    h = jnp.where(h >= 0.0, h, PRELU_INIT * h)
    return h @ w2.T + b2[:, 0]


if __name__ == "__main__":
    key = jax.random.PRNGKey(0)
    kx, kp = jax.random.split(key)
    w1, b1, w2, b2 = init_params(kp)

    # 1) Feature-major Pallas path, 128-aligned batch (2 grid steps of 128 lanes).
    B = 256
    xT = jax.random.normal(kx, (3, B), jnp.float32)
    out_T = jax.block_until_ready(net_forward_feature_major(xT, w1, b1, w2, b2, decode=True))
    ref_T = jnp.transpose(net_reference(jnp.transpose(xT), w1, b1, w2, b2))
    assert out_T.shape == (2, B)
    assert jnp.allclose(out_T, ref_T, atol=1e-5, rtol=1e-5), "mismatch (feature-major path)"

    # 2) Non-aligned, multi-tile batch via the batch-major wrapper, Pallas path forced.
    B2 = 1337
    x2 = jax.random.normal(jax.random.PRNGKey(1), (B2, 3), jnp.float32)
    out2 = jax.block_until_ready(net_forward(x2, w1, b1, w2, b2, decode=False, use_pallas=True))
    ref2 = net_reference(x2, w1, b1, w2, b2)
    assert out2.shape == (B2, 2)
    assert jnp.allclose(out2, ref2, atol=1e-5, rtol=1e-5), "mismatch (multi-tile batch)"

    # 3) Tiny batch -> plain-JAX fallback (launch + layout overhead would dominate).
    B3 = 8
    x3 = jax.random.normal(jax.random.PRNGKey(2), (B3, 3), jnp.float32)
    out3 = jax.block_until_ready(net_forward(x3, w1, b1, w2, b2, decode=True))
    assert out3.shape == (B3, 2)
    assert jnp.allclose(out3, net_reference(x3, w1, b1, w2, b2), atol=1e-5, rtol=1e-5), \
        "mismatch (small-batch fallback)"

    print("KERNEL_OK")
</pallas_src>

<mosaic_0001>
module attributes {stable_mosaic.version = 11 : i64} {
  func.func @net_kernel(%arg0: i32, %arg1: memref<3x128xf32, #tpu.memory_space<vmem>>, %arg2: memref<10x3xf32, #tpu.memory_space<vmem>>, %arg3: memref<10x1xf32, #tpu.memory_space<vmem>>, %arg4: memref<2x10xf32, #tpu.memory_space<vmem>>, %arg5: memref<2x1xf32, #tpu.memory_space<vmem>>, %arg6: memref<2x128xf32, #tpu.memory_space<vmem>>) attributes {dimension_semantics = [#tpu.dimension_semantics<parallel>], iteration_bounds = array<i64: 2>, scalar_prefetch = 0 : i64, scratch_operands = 0 : i64, tpu.core_type = #tpu.core_type<tc>, window_params = [{transform_indices = @transform_0, window_bounds = array<i64: 3, 128>}, {pipeline_mode = #tpu.pipeline_mode<synchronous>, transform_indices = @transform_1, window_bounds = array<i64: 10, 3>}, {pipeline_mode = #tpu.pipeline_mode<synchronous>, transform_indices = @transform_2, window_bounds = array<i64: 10, 1>}, {pipeline_mode = #tpu.pipeline_mode<synchronous>, transform_indices = @transform_3, window_bounds = array<i64: 2, 10>}, {pipeline_mode = #tpu.pipeline_mode<synchronous>, transform_indices = @transform_4, window_bounds = array<i64: 2, 1>}, {transform_indices = @transform_5, window_bounds = array<i64: 2, 128>}]} {
    %c0 = arith.constant 0 : index
    %c0_0 = arith.constant 0 : index
    %0 = vector.load %arg2[%c0, %c0_0] : memref<10x3xf32, #tpu.memory_space<vmem>>, vector<10x3xf32>
    %c0_1 = arith.constant 0 : index
    %c0_2 = arith.constant 0 : index
    %1 = vector.load %arg1[%c0_1, %c0_2] : memref<3x128xf32, #tpu.memory_space<vmem>>, vector<3x128xf32>
    %cst = arith.constant dense<0.000000e+00> : vector<10x128xf32>
    %2 = tpu.matmul %0, %1, %cst {dimension_numbers = #tpu.dot_dimension_numbers<[1], [0], [0], [1], [0, 0, 1, 1], [], []>} : vector<10x3xf32>, vector<3x128xf32>, vector<10x128xf32> -> vector<10x128xf32>
    %c0_3 = arith.constant 0 : index
    %c0_4 = arith.constant 0 : index
    %3 = vector.load %arg3[%c0_3, %c0_4] : memref<10x1xf32, #tpu.memory_space<vmem>>, vector<10x1xf32>
    %4 = vector.broadcast %3 : vector<10x1xf32> to vector<10x128xf32>
    %5 = arith.addf %2, %4 : vector<10x128xf32>
    %cst_5 = arith.constant 0.000000e+00 : f32
    %6 = vector.broadcast %cst_5 : f32 to vector<10x128xf32>
    %7 = arith.cmpf oge, %5, %6 : vector<10x128xf32>
    %cst_6 = arith.constant 2.500000e-01 : f32
    %8 = vector.broadcast %cst_6 : f32 to vector<10x128xf32>
    %9 = arith.mulf %8, %5 : vector<10x128xf32>
    %10 = arith.select %7, %5, %9 : vector<10x128xi1>, vector<10x128xf32>
    %c0_7 = arith.constant 0 : index
    %c0_8 = arith.constant 0 : index
    %11 = vector.load %arg4[%c0_7, %c0_8] : memref<2x10xf32, #tpu.memory_space<vmem>>, vector<2x10xf32>
    %cst_9 = arith.constant dense<0.000000e+00> : vector<2x128xf32>
    %12 = tpu.matmul %11, %10, %cst_9 {dimension_numbers = #tpu.dot_dimension_numbers<[1], [0], [0], [1], [0, 0, 1, 1], [], []>} : vector<2x10xf32>, vector<10x128xf32>, vector<2x128xf32> -> vector<2x128xf32>
    %c0_10 = arith.constant 0 : index
    %c0_11 = arith.constant 0 : index
    %13 = vector.load %arg5[%c0_10, %c0_11] : memref<2x1xf32, #tpu.memory_space<vmem>>, vector<2x1xf32>
    %14 = vector.broadcast %13 : vector<2x1xf32> to vector<2x128xf32>
    %15 = arith.addf %12, %14 : vector<2x128xf32>
    %c0_12 = arith.constant 0 : index
    %c0_13 = arith.constant 0 : index
    %16 = vector.load %arg6[%c0_12, %c0_13] : memref<2x128xf32, #tpu.memory_space<vmem>>, vector<2x128xf32>
    tpu.vector_store %arg6[%c0_12, %c0_13], %15 {strides = array<i32>} : memref<2x128xf32, #tpu.memory_space<vmem>>, vector<2x128xf32>,
    return
  }
  func.func @transform_0(%arg0: i32) -> (i32, i32) {
    %c0_i32 = arith.constant 0 : i32
    %c0_i32_0 = arith.constant 0 : i32
    return %c0_i32, %arg0 : i32, i32
  }
  func.func @transform_1(%arg0: i32) -> (i32, i32) {
    %c0_i32 = arith.constant 0 : i32
    %c0_i32_0 = arith.constant 0 : i32
    %c0_i32_1 = arith.constant 0 : i32
    return %c0_i32, %c0_i32_0 : i32, i32
  }
  func.func @transform_2(%arg0: i32) -> (i32, i32) {
    %c0_i32 = arith.constant 0 : i32
    %c0_i32_0 = arith.constant 0 : i32
    %c0_i32_1 = arith.constant 0 : i32
    return %c0_i32, %c0_i32_0 : i32, i32
  }
  func.func @transform_3(%arg0: i32) -> (i32, i32) {
    %c0_i32 = arith.constant 0 : i32
    %c0_i32_0 = arith.constant 0 : i32
    %c0_i32_1 = arith.constant 0 : i32
    return %c0_i32, %c0_i32_0 : i32, i32
  }
  func.func @transform_4(%arg0: i32) -> (i32, i32) {
    %c0_i32 = arith.constant 0 : i32
    %c0_i32_0 = arith.constant 0 : i32
    %c0_i32_1 = arith.constant 0 : i32
    return %c0_i32, %c0_i32_0 : i32, i32
  }
  func.func @transform_5(%arg0: i32) -> (i32, i32) {
    %c0_i32 = arith.constant 0 : i32
    %c0_i32_0 = arith.constant 0 : i32
    return %c0_i32, %arg0 : i32, i32
  }
}

</mosaic_0001>

<llo_original>
// kernel: tpu_custom_call.1
$region0: #{tpu_custom_call.1}
  #allocation0 [shape = 'u32[]', space=smem, size = 0x4, offset = 0x4, fixed_abs, tag = 'smem constant byte address 0x4 - core index']
  #allocation1 [shape = 'u32[144,128]{1,0:T(1,128)}', space=vmem, size = 0x12000, scoped, tag = 'internal scratch']
  %s0 = inlined_call_operand.vmem [shape: f32[3,256], index: 0, kind: input, shape index: {}]
  %s1 = inlined_call_operand.vmem [shape: f32[10,3], index: 1, kind: input, shape index: {}]
  %s2 = inlined_call_operand.vmem [shape: f32[10,1], index: 2, kind: input, shape index: {}]
  %s3 = inlined_call_operand.vmem [shape: f32[2,10], index: 3, kind: input, shape index: {}]
  %s4 = inlined_call_operand.vmem [shape: f32[2,1], index: 4, kind: input, shape index: {}]
  %s5 = inlined_call_operand.hbm [shape: f32[2,256], index: 5, kind: output, shape index: {}]
  %s6 = sld [smem:[#allocation0]]
  $region53: #{tpu_custom_call.1} parent=0
    _
  %s8 = ssub.s32 1, %s6
  %s9 = scalar_select 0, %s8, %s6
  $region1: #{tpu_custom_call.1} parent=0
    #allocation2 [shape = 'u8[2048]{0}', space=vmem, size = 0x800, scoped, tag = 'output window, operand 0']
    #allocation3 [shape = 's32[2]{0}', space=sflag, size = 0x8, scoped, tag = 'scoped memory for tpu_custom_call.1']
    %10 = vsyncpa [#allocation3], 0
    %s11 = scalar_lea.sflag [#allocation3], 1
    %12 = vsyncpa %s11, 0
    loop: start=0, step=1, limit=4
    $region2: #{tpu_custom_call.1} parent=1 // loop_pre_header
      _
    $region3: #{tpu_custom_call.1} parent=1 // loop_header
      %s14 = sphi 0, %s18
      %p15 = scmp.ge.s32.totalorder %s14, 4
      %s24 = sphi 0, %s26
      %s27 = sphi 0, %s24
      %s28 = sphi 0, %s27
      %s44 = sphi 0, %s28
      %s48 = sphi 0, %s48
      %s50 = sphi 0, %s48
      %s51 = sphi 0, %s50
      %s65 = sphi 0, %s51
      %s69 = sphi 0, %s69
      %s71 = sphi 0, %s69
      %s72 = sphi 0, %s71
      %s86 = sphi 0, %s72
      %s90 = sphi 0, %s90
      %s92 = sphi 0, %s90
      %s93 = sphi 0, %s92
      %s107 = sphi 0, %s93
      %s111 = sphi 0, %s111
      %s113 = sphi 0, %s111
      %s114 = sphi 0, %s113
      %s128 = sphi 0, %s114
      %s134 = sphi 0, %s136
      %s137 = sphi 0, %s134
      %s138 = sphi 0, %s137
      %s154 = sphi 0, %s138
    $region4: #{tpu_custom_call.1} parent=1 // loop_header_branch
      %17 = sbr.rel (%p15) target = $region8
    $region5: #{tpu_custom_call.1} parent=1 // loop_body
      %s19 = ssub.s32 %s14, 1
      %s20 = ssub.s32 %s14, 2
      %s21 = sadd.s32 %s14, 1
      %s22 = ssub.s32 %s14, %s21
      %p23 = scmp.eq.s32.totalorder %s22, 0
      %s25 = sadd.s32 %s24, 1
      %s26 = scalar_select %p23, %s24, %s25
      %p29 = pneg %p23
      %p30 = scmp.eq.s32.totalorder %s14, 1
      %p31 = por %p29, %p30
      %p32 = scmp.ne.s32.totalorder %s24, %s27
      %p33 = scmp.eq.s32.totalorder %s14, 0
      %p34 = por %p32, %p33
      %p35 = scmp.ne.s32.totalorder %s24, %s27
      %p36 = scmp.eq.s32.totalorder %s19, 1
      %p37 = por %p35, %p36
      %p38 = scmp.ne.s32.totalorder %s27, %s28
      %p39 = scmp.eq.s32.totalorder %s19, 0
      %p40 = por %p38, %p39
      %p41 = scmp.ne.s32.totalorder %s27, %s28
      %p42 = scmp.eq.s32.totalorder %s20, 1
      %p43 = por %p41, %p42
      %p45 = scmp.ne.s32.totalorder %s28, %s44
      %p46 = scmp.eq.s32.totalorder %s20, 0
      %p47 = por %p45, %p46
      %s49 = sadd.s32 %s48, 1
      %p52 = scmp.eq.s32.totalorder %s14, 1
      %p53 = scmp.ne.s32.totalorder %s48, %s50
      %p54 = scmp.eq.s32.totalorder %s14, 0
      %p55 = por %p53, %p54
      %p56 = scmp.ne.s32.totalorder %s48, %s50
      %p57 = scmp.eq.s32.totalorder %s19, 1
      %p58 = por %p56, %p57
      %p59 = scmp.ne.s32.totalorder %s50, %s51
      %p60 = scmp.eq.s32.totalorder %s19, 0
      %p61 = por %p59, %p60
      %p62 = scmp.ne.s32.totalorder %s50, %s51
      %p63 = scmp.eq.s32.totalorder %s20, 1
      %p64 = por %p62, %p63
      %p66 = scmp.ne.s32.totalorder %s51, %s65
      %p67 = scmp.eq.s32.totalorder %s20, 0
      %p68 = por %p66, %p67
      %s70 = sadd.s32 %s69, 1
      %p73 = scmp.eq.s32.totalorder %s14, 1
      %p74 = scmp.ne.s32.totalorder %s69, %s71
      %p75 = scmp.eq.s32.totalorder %s14, 0
      %p76 = por %p74, %p75
      %p77 = scmp.ne.s32.totalorder %s69, %s71
      %p78 = scmp.eq.s32.totalorder %s19, 1
      %p79 = por %p77, %p78
      %p80 = scmp.ne.s32.totalorder %s71, %s72
      %p81 = scmp.eq.s32.totalorder %s19, 0
      %p82 = por %p80, %p81
      %p83 = scmp.ne.s32.totalorder %s71, %s72
      %p84 = scmp.eq.s32.totalorder %s20, 1
      %p85 = por %p83, %p84
      %p87 = scmp.ne.s32.totalorder %s72, %s86
      %p88 = scmp.eq.s32.totalorder %s20, 0
      %p89 = por %p87, %p88
      %s91 = sadd.s32 %s90, 1
      %p94 = scmp.eq.s32.totalorder %s14, 1
      %p95 = scmp.ne.s32.totalorder %s90, %s92
      %p96 = scmp.eq.s32.totalorder %s14, 0
      %p97 = por %p95, %p96
      %p98 = scmp.ne.s32.totalorder %s90, %s92
      %p99 = scmp.eq.s32.totalorder %s19, 1
      %p100 = por %p98, %p99
      %p101 = scmp.ne.s32.totalorder %s92, %s93
      %p102 = scmp.eq.s32.totalorder %s19, 0
      %p103 = por %p101, %p102
      %p104 = scmp.ne.s32.totalorder %s92, %s93
      %p105 = scmp.eq.s32.totalorder %s20, 1
      %p106 = por %p104, %p105
      %p108 = scmp.ne.s32.totalorder %s93, %s107
      %p109 = scmp.eq.s32.totalorder %s20, 0
      %p110 = por %p108, %p109
      %s112 = sadd.s32 %s111, 1
      %p115 = scmp.eq.s32.totalorder %s14, 1
      %p116 = scmp.ne.s32.totalorder %s111, %s113
      %p117 = scmp.eq.s32.totalorder %s14, 0
      %p118 = por %p116, %p117
      %p119 = scmp.ne.s32.totalorder %s111, %s113
      %p120 = scmp.eq.s32.totalorder %s19, 1
      %p121 = por %p119, %p120
      %p122 = scmp.ne.s32.totalorder %s113, %s114
      %p123 = scmp.eq.s32.totalorder %s19, 0
      %p124 = por %p122, %p123
      %p125 = scmp.ne.s32.totalorder %s113, %s114
      %p126 = scmp.eq.s32.totalorder %s20, 1
      %p127 = por %p125, %p126
      %p129 = scmp.ne.s32.totalorder %s114, %s128
      %p130 = scmp.eq.s32.totalorder %s20, 0
      %p131 = por %p129, %p130
      %s132 = ssub.s32 %s14, %s21
      %p133 = scmp.eq.s32.totalorder %s132, 0
      %s135 = sadd.s32 %s134, 1
      %s136 = scalar_select %p133, %s134, %s135
      %p139 = pneg %p133
      %p140 = scmp.eq.s32.totalorder %s14, 1
      %p141 = por %p139, %p140
      %p142 = scmp.ne.s32.totalorder %s134, %s137
      %p143 = scmp.eq.s32.totalorder %s14, 0
      %p144 = por %p142, %p143
      %p145 = scmp.ne.s32.totalorder %s134, %s137
      %p146 = scmp.eq.s32.totalorder %s19, 1
      %p147 = por %p145, %p146
      %p148 = scmp.ne.s32.totalorder %s137, %s138
      %p149 = scmp.eq.s32.totalorder %s19, 0
      %p150 = por %p148, %p149
      %p151 = scmp.ne.s32.totalorder %s137, %s138
      %p152 = scmp.eq.s32.totalorder %s20, 1
      %p153 = por %p151, %p152
      %p155 = scmp.ne.s32.totalorder %s138, %s154
      %p156 = scmp.eq.s32.totalorder %s20, 0
      %p157 = por %p155, %p156
      %p158 = scmp.le.s32.totalorder 1, %s14
      %p159 = scmp.lt.s32.totalorder %s14, 3
      %p160 = pnand %p158, %p159
      %p161 = pneg %p160
      // Predicated region
      $region9: #{tpu_custom_call.1} parent=5 // pred_check
        _
      $region10: #{tpu_custom_call.1} parent=5 // pred_check_branch
        %163 = sbr.rel (%p160) target = $region12
      $region11: #{tpu_custom_call.1} parent=5 // pred_region
        %s164 = ssub.s32 %s14, 1
        // Predicated region
        $region13: #{tpu_custom_call.1} parent=11 // pred_check
          %p165 = pneg %p61
        $region14: #{tpu_custom_call.1} parent=11 // pred_check_branch
          %167 = sbr.rel (%p165) target = $region16
        $region15: #{tpu_custom_call.1} parent=11 // pred_region
          _
        $region16: #{tpu_custom_call.1} parent=11 // pred_fallthru
          _
        // Predicated region
        $region17: #{tpu_custom_call.1} parent=11 // pred_check
          %p168 = pneg %p82
        $region18: #{tpu_custom_call.1} parent=11 // pred_check_branch
          %170 = sbr.rel (%p168) target = $region20
        $region19: #{tpu_custom_call.1} parent=11 // pred_region
          _
        $region20: #{tpu_custom_call.1} parent=11 // pred_fallthru
          _
        // Predicated region
        $region21: #{tpu_custom_call.1} parent=11 // pred_check
          %p171 = pneg %p103
        $region22: #{tpu_custom_call.1} parent=11 // pred_check_branch
          %173 = sbr.rel (%p171) target = $region24
        $region23: #{tpu_custom_call.1} parent=11 // pred_region
          _
        $region24: #{tpu_custom_call.1} parent=11 // pred_fallthru
          _
        // Predicated region
        $region25: #{tpu_custom_call.1} parent=11 // pred_check
          %p174 = pneg %p124
        $region26: #{tpu_custom_call.1} parent=11 // pred_check_branch
          %176 = sbr.rel (%p174) target = $region28
        $region27: #{tpu_custom_call.1} parent=11 // pred_region
          _
        $region28: #{tpu_custom_call.1} parent=11 // pred_fallthru
          _
      $region12: #{tpu_custom_call.1} parent=5 // pred_fallthru
        _
      %p177 = scmp.lt.s32.totalorder %s14, 2
      // Predicated region
      $region29: #{tpu_custom_call.1} parent=5 // pred_check
        %p178 = pneg %p177
      $region30: #{tpu_custom_call.1} parent=5 // pred_check_branch
        %180 = sbr.rel (%p178) target = $region32
      $region31: #{tpu_custom_call.1} parent=5 // pred_region
        // Predicated region
        $region33: #{tpu_custom_call.1} parent=31 // pred_check
          %p181 = pneg %p34
        $region34: #{tpu_custom_call.1} parent=31 // pred_check_branch
          %183 = sbr.rel (%p181) target = $region36
        $region35: #{tpu_custom_call.1} parent=31 // pred_region
          %p184 = scmp.lt.s32.totalorder %s14, 1
          %s185 = scalar_select %p184, %s14, 1
          %s186 = smul.addr %s185, 4
          %s187 = scalar_lea.vmem %s0, %s186
        $region36: #{tpu_custom_call.1} parent=31 // pred_fallthru
          _
      $region32: #{tpu_custom_call.1} parent=5 // pred_fallthru
        _
      %p188 = scmp.le.s32.totalorder 1, %s14
      %p189 = scmp.lt.s32.totalorder %s14, 3
      %p190 = pnand %p188, %p189
      %p191 = pneg %p190
      // Predicated region
      $region37: #{tpu_custom_call.1} parent=5 // pred_check
        _
      $region38: #{tpu_custom_call.1} parent=5 // pred_check_branch
        %193 = sbr.rel (%p190) target = $region40
      $region39: #{tpu_custom_call.1} parent=5 // pred_region
        %s194 = ssub.s32 %s14, 1
        %p195 = scmp.lt.s32.totalorder %s19, 1
        %s196 = scalar_select %p195, %s19, 1
        %s197 = smul.addr %s196, 4
        %s198 = scalar_lea.vmem %s0, %s197
        %p199 = pneg %p40
        %p200 = pneg %p37
        %p201 = pneg %p61
        %p202 = pneg %p58
        %p203 = pneg %p82
        %p204 = pneg %p79
        %p205 = pneg %p103
        %p206 = pneg %p100
        %p207 = pneg %p124
        %p208 = pneg %p121
        %p209 = pneg %p150
        %p210 = pneg %p147
        %s211 = sand.u32 %s137, 1
        %s212 = scalar_lea.sflag [#allocation3], %s211
        %s213 = sand.u32 %s137, 1
        %s214 = smul.addr %s213, 2
        %s215 = scalar_lea.vmem [#allocation2], %s214
        %p216 = scmp.lt.s32.totalorder %s19, 1
        %s217 = scalar_select %p216, %s19, 1
        %s218 = smul.addr %s217, 4
        %s219 = scalar_lea.vmem %s0, %s218
        %v220 = vld [vmem:[%s1] sm:$0xff]
        %v221 = vld [vmem:[%s1 + $0x8] sm:$0x3]
        %v222 = vld [vmem:[%s219] sm:$0x7]
        %v223 = vld [vmem:[%s2] sm:$0xff]
        %v224 = vld [vmem:[%s2 + $0x8] sm:$0x3]
        %226 = vset.pattern.permute.xlu0 0
        %227 = vperm.xlu0 %226, %v223
        %v228 = vpop.permute.xlu0 %227
        %231 = vset.pattern.permute.xlu0 0
        %232 = vperm.xlu0 %231, %v224
        %v233 = vpop.permute.xlu0 %232
        %vm235 = vcmask 23552
        %v237 = vsel %vm235, %v220, 0
        %v240 = vsel %vm235, %v221, 0
        %vm242 = vcmask 1042432
        %v244 = vsel %vm242, %v222, 0
        %246 = vmatprep.subr.mxu0 0.0
        %247 = vmatpush1.msra.mxu0 %v244
        %248 = vmatprep.subr.mxu0 0.0
        %249 = vmatpush1.msra.mxu0 0.0
        %250 = vmatprep.subr.mxu0 0.0
        %251 = vmatpush1.msra.mxu0 0.0
        %252 = vmatprep.subr.mxu0 0.0
        %253 = vmatpush1.msra.mxu0 0.0
        %254 = vmatprep.subr.mxu0 0.0
        %255 = vmatpush1.msra.mxu0 0.0
        %256 = vmatprep.subr.mxu0 0.0
        %257 = vmatpush1.msra.mxu0 0.0
        %258 = vmatprep.subr.mxu0 0.0
        %259 = vmatpush1.msra.mxu0 0.0
        %260 = vmatprep.subr.mxu0 0.0
        %261 = vmatpush1.msra.mxu0 0.0
        %262 = vmatprep.subr.mxu0 0.0
        %263 = vmatpush1.msra.mxu0 0.0
        %264 = vmatprep.subr.mxu0 0.0
        %265 = vmatpush1.msra.mxu0 0.0
        %266 = vmatprep.subr.mxu0 0.0
        %267 = vmatpush1.msra.mxu0 0.0
        %268 = vmatprep.subr.mxu0 0.0
        %269 = vmatpush1.msra.mxu0 0.0
        %270 = vmatprep.subr.mxu0 0.0
        %271 = vmatpush1.msra.mxu0 0.0
        %272 = vmatprep.subr.mxu0 0.0
        %273 = vmatpush1.msra.mxu0 0.0
        %274 = vmatprep.subr.mxu0 0.0
        %275 = vmatpush1.msra.mxu0 0.0
        %276 = vmatprep.subr.mxu0 0.0
        %277 = vmatpush1.msra.mxu0 0.0
        %278 = vmatprep.subr.mxu0 0.0
        %279 = vmatpush1.msra.mxu0 0.0
        %280 = vmatprep.subr.mxu0 0.0
        %281 = vmatpush1.msra.mxu0 0.0
        %282 = vmatprep.subr.mxu0 0.0
        %283 = vmatpush1.msra.mxu0 0.0
        %284 = vmatprep.subr.mxu0 0.0
        %285 = vmatpush1.msra.mxu0 0.0
        %286 = vmatprep.subr.mxu0 0.0
        %287 = vmatpush1.msra.mxu0 0.0
        %288 = vmatprep.subr.mxu0 0.0
        %289 = vmatpush1.msra.mxu0 0.0
        %290 = vmatprep.subr.mxu0 0.0
        %291 = vmatpush1.msra.mxu0 0.0
        %292 = vmatprep.subr.mxu0 0.0
        %293 = vmatpush1.msra.mxu0 0.0
        %294 = vmatprep.subr.mxu0 0.0
        %295 = vmatpush1.msra.mxu0 0.0
        %296 = vmatprep.subr.mxu0 0.0
        %297 = vmatpush1.msra.mxu0 0.0
        %298 = vmatprep.subr.mxu0 0.0
        %299 = vmatpush1.msra.mxu0 0.0
        %300 = vmatprep.subr.mxu0 0.0
        %301 = vmatpush1.msra.mxu0 0.0
        %302 = vmatprep.subr.mxu0 0.0
        %303 = vmatpush1.msra.mxu0 0.0
        %304 = vmatprep.subr.mxu0 0.0
        %305 = vmatpush1.msra.mxu0 0.0
        %306 = vmatprep.subr.mxu0 0.0
        %307 = vmatpush1.msra.mxu0 0.0
        %308 = vmatprep.subr.mxu0 0.0
        %309 = vmatpush1.msra.mxu0 0.0
        %310 = vmatprep.mubr.f32.mxu0 0.0
        %311 = vmatmul.mubr.f32.gmra.mrb[0].mxu0 %v237
        %v312 = vpop.f32.mrb[0].mxu0
        %v313 = vadd.f32 %v228, %v312
        %v314 = vpop.f32.mrb[0].mxu0
        %315 = vmatprep.mubr.f32.mxu0 0.0
        %316 = vmatmul.mubr.f32.gmra.mrb[0].mxu0 %v240
        %v317 = vpop.f32.mrb[0].mxu0
        %v318 = vadd.f32 %v233, %v317
        %v319 = vpop.f32.mrb[0].mxu0
        %320 = vdwg.mxu0
        %vm321 = vcmp.ge.f32.partialorder %v313, 0.0
        %vm322 = vcmp.ge.f32.partialorder %v318, 0.0
        %v323 = vmul.f32 %v313, 0.25
        %v324 = vmul.f32 %v318, 0.25
        %v325 = vsel %vm321, %v313, %v323
        %v326 = vsel %vm322, %v318, %v324
        %v327 = vld [vmem:[%s3] sm:$0x3]
        %v328 = vld [vmem:[%s4] sm:$0x3]
        %330 = vset.pattern.permute.xlu0 0
        %331 = vperm.xlu0 %330, %v328
        %v332 = vpop.permute.xlu0 %331
        %vm334 = vcmask 80896
        %v336 = vsel %vm334, %v327, 0
        %vm338 = vcmask 1041408
        %v340 = vsel %vm338, %v326, 0
        %342 = vmatprep.subr.mxu0 0.0
        %343 = vmatpush1.msra.mxu0 %v325
        %344 = vmatprep.subr.mxu0 0.0
        %345 = vmatpush1.msra.mxu0 %v340
        %346 = vmatprep.subr.mxu0 0.0
        %347 = vmatpush1.msra.mxu0 0.0
        %348 = vmatprep.subr.mxu0 0.0
        %349 = vmatpush1.msra.mxu0 0.0
        %350 = vmatprep.subr.mxu0 0.0
        %351 = vmatpush1.msra.mxu0 0.0
        %352 = vmatprep.subr.mxu0 0.0
        %353 = vmatpush1.msra.mxu0 0.0
        %354 = vmatprep.subr.mxu0 0.0
        %355 = vmatpush1.msra.mxu0 0.0
        %356 = vmatprep.subr.mxu0 0.0
        %357 = vmatpush1.msra.mxu0 0.0
        %358 = vmatprep.subr.mxu0 0.0
        %359 = vmatpush1.msra.mxu0 0.0
        %360 = vmatprep.subr.mxu0 0.0
        %361 = vmatpush1.msra.mxu0 0.0
        %362 = vmatprep.subr.mxu0 0.0
        %363 = vmatpush1.msra.mxu0 0.0
        %364 = vmatprep.subr.mxu0 0.0
        %365 = vmatpush1.msra.mxu0 0.0
        %366 = vmatprep.subr.mxu0 0.0
        %367 = vmatpush1.msra.mxu0 0.0
        %368 = vmatprep.subr.mxu0 0.0
        %369 = vmatpush1.msra.mxu0 0.0
        %370 = vmatprep.subr.mxu0 0.0
        %371 = vmatpush1.msra.mxu0 0.0
        %372 = vmatprep.subr.mxu0 0.0
        %373 = vmatpush1.msra.mxu0 0.0
        %374 = vmatprep.subr.mxu0 0.0
        %375 = vmatpush1.msra.mxu0 0.0
        %376 = vmatprep.subr.mxu0 0.0
        %377 = vmatpush1.msra.mxu0 0.0
        %378 = vmatprep.subr.mxu0 0.0
        %379 = vmatpush1.msra.mxu0 0.0
        %380 = vmatprep.subr.mxu0 0.0
        %381 = vmatpush1.msra.mxu0 0.0
        %382 = vmatprep.subr.mxu0 0.0
        %383 = vmatpush1.msra.mxu0 0.0
        %384 = vmatprep.subr.mxu0 0.0
        %385 = vmatpush1.msra.mxu0 0.0
        %386 = vmatprep.subr.mxu0 0.0
        %387 = vmatpush1.msra.mxu0 0.0
        %388 = vmatprep.subr.mxu0 0.0
        %389 = vmatpush1.msra.mxu0 0.0
        %390 = vmatprep.subr.mxu0 0.0
        %391 = vmatpush1.msra.mxu0 0.0
        %392 = vmatprep.subr.mxu0 0.0
        %393 = vmatpush1.msra.mxu0 0.0
        %394 = vmatprep.subr.mxu0 0.0
        %395 = vmatpush1.msra.mxu0 0.0
        %396 = vmatprep.subr.mxu0 0.0
        %397 = vmatpush1.msra.mxu0 0.0
        %398 = vmatprep.subr.mxu0 0.0
        %399 = vmatpush1.msra.mxu0 0.0
        %400 = vmatprep.subr.mxu0 0.0
        %401 = vmatpush1.msra.mxu0 0.0
        %402 = vmatprep.subr.mxu0 0.0
        %403 = vmatpush1.msra.mxu0 0.0
        %404 = vmatprep.subr.mxu0 0.0
        %405 = vmatpush1.msra.mxu0 0.0
        %406 = vmatprep.mubr.f32.mxu0 0.0
        %407 = vmatmul.mubr.f32.gmra.mrb[0].mxu0 %v336
        %v408 = vpop.f32.mrb[0].mxu0
        %v409 = vadd.f32 %v332, %v408
        %v410 = vpop.f32.mrb[0].mxu0
        %411 = vdwg.mxu0
        %412 = vst [vmem:[%s215] sm:$0x3] %v409
        %s413 = sand.u32 %s137, 1
        %s414 = scalar_lea.sflag [#allocation3], %s413
        %s415 = sand.u32 %s137, 1
        %s416 = smul.addr %s415, 2
        %s417 = scalar_lea.vmem [#allocation2], %s416
        // Predicated region
        $region41: #{tpu_custom_call.1} parent=39 // pred_check
          %p418 = pneg %p147
        $region42: #{tpu_custom_call.1} parent=39 // pred_check_branch
          %420 = sbr.rel (%p418) target = $region44
        $region43: #{tpu_custom_call.1} parent=39 // pred_region
          %s422 = ssub.s32 32, 32
          %423 = vsyncadd %s414, %s422
          %s424 = smul.addr %s19, 32
          %s425 = scalar_lea.hbm %s5, %s424
          %s427 = sshll.u32 %s417, 4
          %s428 = int_to_ptr.vmem [resolvable:$true] %s427
          %430 = dma.vmem_to_hbm [thread:$0]  %s428, 32, %s425, %s414
        $region44: #{tpu_custom_call.1} parent=39 // pred_fallthru
          _
      $region40: #{tpu_custom_call.1} parent=5 // pred_fallthru
        _
      %p431 = scmp.le.s32.totalorder 2, %s14
      // Predicated region
      $region45: #{tpu_custom_call.1} parent=5 // pred_check
        %p432 = pneg %p431
      $region46: #{tpu_custom_call.1} parent=5 // pred_check_branch
        %434 = sbr.rel (%p432) target = $region48
      $region47: #{tpu_custom_call.1} parent=5 // pred_region
        %s435 = ssub.s32 %s14, 2
        // Predicated region
        $region49: #{tpu_custom_call.1} parent=47 // pred_check
          %p436 = pneg %p153
        $region50: #{tpu_custom_call.1} parent=47 // pred_check_branch
          %438 = sbr.rel (%p436) target = $region52
        $region51: #{tpu_custom_call.1} parent=47 // pred_region
          %s439 = sand.u32 %s138, 1
          %s440 = scalar_lea.sflag [#allocation3], %s439
          %s441 = sand.u32 %s138, 1
          %s442 = smul.addr %s441, 2
          %s443 = scalar_lea.vmem [#allocation2], %s442
          %444 = dma.done %s440, 32
        $region52: #{tpu_custom_call.1} parent=47 // pred_fallthru
          _
      $region48: #{tpu_custom_call.1} parent=5 // pred_fallthru
        _
    $region6: #{tpu_custom_call.1} parent=1 // loop_footer
      %s18 = sadd.s32 1, %s14
    $region7: #{tpu_custom_call.1} parent=1 // loop_footer_branch
      %13 = sbr.rel target = $region3
    $region8: #{tpu_custom_call.1} parent=1 // loop_exit
      _
    %445 = vsyncpa [#allocation3], 1
    %s446 = scalar_lea.sflag [#allocation3], 1
    %447 = vsyncpa %s446, 1

</llo_original>
